<compile_context>
chip_gen: v6e
topology: v6e:2x2x1
jax: 0.10.0
libtpu: 0.0.40
codegen_flags: <defaults>
</compile_context>

<pallas_src>
import functools

import numpy as np
import jax
import jax.numpy as jnp
from jax.experimental import pallas as pl
from jax.experimental.pallas import tpu as pltpu


# ---------------------------------------------------------------------------
# Fused Pallas kernel over compact active rows:
#   out = relu( scale * (patches @ W) + shift [+ residual] )
# patches: (tm, K*Cin) bf16, W: (K*Cin, Cout) bf16 (resident), epilogue f32.
# ---------------------------------------------------------------------------
def _fused_matmul_kernel(*refs, relu, has_res):
    if has_res:
        p_ref, w_ref, scale_ref, shift_ref, res_ref, o_ref = refs
    else:
        p_ref, w_ref, scale_ref, shift_ref, o_ref = refs
    y = jnp.dot(p_ref[...], w_ref[...], preferred_element_type=jnp.float32)
    y = y * scale_ref[...] + shift_ref[...]
    if has_res:
        y = y + res_ref[...]
    if relu:
        y = jnp.maximum(y, 0.0)
    o_ref[...] = y.astype(o_ref.dtype)


def _round_up(x, m):
    return ((x + m - 1) // m) * m


def fused_linear_rows(patches, w_bf16, scale, shift, residual=None,
                      relu=True, tm=256):
    """patches: (M, Kc), w_bf16: (Kc, Cout) bf16, scale/shift: (1, Cout) f32,
    residual: (M, Cout) f32 or None.  Returns (M, Cout) f32."""
    M, Kc = patches.shape
    Cout = w_bf16.shape[1]
    # Row-tile: multiple of 128 (safe sublane alignment for bf16/f32), capped.
    tm_eff = min(tm, _round_up(max(M, 1), 128))
    Mp = _round_up(M, tm_eff)
    pad = Mp - M

    p = patches.astype(jnp.bfloat16)
    if pad:
        p = jnp.pad(p, ((0, pad), (0, 0)))

    has_res = residual is not None
    args = [p, w_bf16, scale, shift]
    in_specs = [
        pl.BlockSpec((tm_eff, Kc), lambda m: (m, 0)),
        pl.BlockSpec((Kc, Cout), lambda m: (0, 0)),    # weight resident in VMEM
        pl.BlockSpec((1, Cout), lambda m: (0, 0)),     # scale resident
        pl.BlockSpec((1, Cout), lambda m: (0, 0)),     # shift resident
    ]
    if has_res:
        r = residual.astype(jnp.float32)
        if pad:
            r = jnp.pad(r, ((0, pad), (0, 0)))
        args.append(r)
        in_specs.append(pl.BlockSpec((tm_eff, Cout), lambda m: (m, 0)))

    out = pl.pallas_call(
        functools.partial(_fused_matmul_kernel, relu=relu, has_res=has_res),
        out_shape=jax.ShapeDtypeStruct((Mp, Cout), jnp.float32),
        grid_spec=pltpu.PrefetchScalarGridSpec(
            num_scalar_prefetch=0,
            grid=(Mp // tm_eff,),
            in_specs=in_specs,
            out_specs=pl.BlockSpec((tm_eff, Cout), lambda m: (m, 0)),
        ),
        compiler_params=pltpu.CompilerParams(
            dimension_semantics=("parallel",),
            vmem_limit_bytes=32 * 1024 * 1024),
    )(*args)
    return out[:M]


# ---------------------------------------------------------------------------
# Sparse glue (plain JAX / host): active-row im2col gather, mask dilation.
# ---------------------------------------------------------------------------
def _gather_patches(dense, out_coords, ksize, stride, padding):
    """Gather the K-tap neighborhoods of the *active output sites only*.
    dense: (N, D, H, W, Cin); out_coords: (M, 4) [b, z, y, x] output coords.
    Returns (M, K*Cin) with the same tap-major/channel-minor layout as the
    folded weight."""
    N, D, H, W, Cin = dense.shape
    kd, kh, kw = ksize
    sd, sh, sw = stride
    pd, ph, pw = padding
    K = kd * kh * kw
    offs = np.array([(i, j, l) for i in range(kd)
                     for j in range(kh) for l in range(kw)], np.int32)
    xf = dense.reshape(N * D * H * W, Cin)
    b = out_coords[:, 0][:, None]
    zi = out_coords[:, 1][:, None] * sd + offs[None, :, 0] - pd
    yi = out_coords[:, 2][:, None] * sh + offs[None, :, 1] - ph
    xi = out_coords[:, 3][:, None] * sw + offs[None, :, 2] - pw
    valid = ((zi >= 0) & (zi < D) & (yi >= 0) & (yi < H)
             & (xi >= 0) & (xi < W))
    zi = jnp.clip(zi, 0, D - 1)
    yi = jnp.clip(yi, 0, H - 1)
    xi = jnp.clip(xi, 0, W - 1)
    flat = ((b * D + zi) * H + yi) * W + xi                # (M, K)
    g = jnp.take(xf, flat, axis=0)                         # (M, K, Cin)
    g = jnp.where(valid[..., None], g, 0.0)
    return g.reshape(out_coords.shape[0], K * Cin)


def sparse_conv_layer(feats, coords, spatial, batch_size, p, *,
                      stride=(1, 1, 1), padding=(1, 1, 1),
                      submanifold=True, relu=True, residual=None):
    """One SubMConv3d/SparseConv3d + BN(eval) + (residual) + ReLU, computed
    only at active output sites.  Returns (out_feats, out_coords, out_spatial)."""
    D, H, W = spatial
    Cin = feats.shape[-1]
    ksize = p['ksize']

    # Dense scatter of the compact features (zeros at inactive sites) so that
    # neighbor gathers see the correct zero contributions.
    dense = jnp.zeros((batch_size, D, H, W, Cin), jnp.float32)
    dense = dense.at[coords[:, 0], coords[:, 1],
                     coords[:, 2], coords[:, 3]].set(feats)

    if submanifold:
        out_coords, out_spatial = coords, spatial
    else:
        mask = jnp.zeros((batch_size, D, H, W), jnp.float32)
        mask = mask.at[coords[:, 0], coords[:, 1],
                       coords[:, 2], coords[:, 3]].set(1.0)
        dil = jax.lax.reduce_window(
            mask, 0.0, jax.lax.max,
            window_dimensions=(1,) + tuple(ksize),
            window_strides=(1,) + tuple(stride),
            padding=((0, 0),) + tuple((pp, pp) for pp in padding))
        out_spatial = tuple(int(s) for s in dil.shape[1:])
        # spconv-style output-index ("rule") generation, done on host just
        # like spconv's CPU indice builder.  Runs outside of jit (eager).
        out_coords = jnp.asarray(
            np.argwhere(np.asarray(dil) > 0.5).astype(np.int32))

    patches = _gather_patches(dense, out_coords, ksize, stride, padding)
    out = fused_linear_rows(patches, p['w'], p['scale'], p['shift'],
                            residual=residual, relu=relu)
    return out, out_coords, out_spatial


def basic_block(feats, coords, spatial, batch_size, block_params):
    """SparseBasicBlock: conv-bn-relu, conv-bn, += identity, relu
    (all on the same active set, so the residual is a compact row add)."""
    p1, p2 = block_params
    identity = feats
    out, _, _ = sparse_conv_layer(feats, coords, spatial, batch_size, p1,
                                  relu=True)
    out, _, _ = sparse_conv_layer(out, coords, spatial, batch_size, p2,
                                  relu=True, residual=identity)
    return out


# ---------------------------------------------------------------------------
# Parameters (deterministic synthetic init; BN in eval mode, eps = 1e-3)
# ---------------------------------------------------------------------------
def make_conv_params(key, cin, cout, ksize, bias, eps=1e-3):
    k1, k2, k3, k4, k5, k6 = jax.random.split(key, 6)
    K = int(np.prod(ksize))
    fan_in = cin * K
    w = jax.random.normal(k1, tuple(ksize) + (cin, cout), jnp.float32)
    w = w / np.sqrt(fan_in)
    b = (0.01 * jax.random.normal(k2, (cout,), jnp.float32)
         if bias else jnp.zeros((cout,), jnp.float32))
    gamma = 1.0 + 0.1 * jax.random.normal(k3, (cout,), jnp.float32)
    beta = 0.1 * jax.random.normal(k4, (cout,), jnp.float32)
    mean = 0.1 * jax.random.normal(k5, (cout,), jnp.float32)
    var = 1.0 + 0.1 * jax.random.uniform(k6, (cout,), jnp.float32)
    scale = gamma / jnp.sqrt(var + eps)
    shift = beta - mean * scale + b * scale
    # Fold taps into the contraction: (kd*kh*kw*Cin, Cout), tap-major.
    w2d = w.reshape(K * cin, cout).astype(jnp.bfloat16)
    return dict(w=w2d, scale=scale.reshape(1, cout),
                shift=shift.reshape(1, cout), ksize=tuple(ksize))


def make_params(key, num_input_features):
    keys = iter(jax.random.split(key, 32))

    def block(cin):
        return (make_conv_params(next(keys), cin, cin, (3, 3, 3), bias=True),
                make_conv_params(next(keys), cin, cin, (3, 3, 3), bias=True))

    p = {}
    p['conv_in'] = make_conv_params(next(keys), num_input_features, 16,
                                    (3, 3, 3), bias=False)
    p['res0a'], p['res0b'] = block(16), block(16)
    p['down1'] = make_conv_params(next(keys), 16, 32, (3, 3, 3), bias=False)
    p['res1a'], p['res1b'] = block(32), block(32)
    p['down2'] = make_conv_params(next(keys), 32, 64, (3, 3, 3), bias=False)
    p['res2a'], p['res2b'] = block(64), block(64)
    p['down3'] = make_conv_params(next(keys), 64, 128, (3, 3, 3), bias=False)
    p['res3a'], p['res3b'] = block(128), block(128)
    p['down4'] = make_conv_params(next(keys), 128, 128, (3, 1, 1), bias=False)
    return p


# ---------------------------------------------------------------------------
# Full forward (matches SpMiddleResNetFHD.forward)
# ---------------------------------------------------------------------------
def sp_middle_resnet_fhd(voxel_features, coors, batch_size, input_shape, params):
    sparse_shape = np.array(input_shape[::-1]) + np.array([1, 0, 0])
    spatial = tuple(int(s) for s in sparse_shape)
    feats = voxel_features.astype(jnp.float32)
    coords = coors.astype(jnp.int32)

    # stage 0 (submanifold, 16 ch)
    feats, coords, spatial = sparse_conv_layer(
        feats, coords, spatial, batch_size, params['conv_in'])
    feats = basic_block(feats, coords, spatial, batch_size, params['res0a'])
    feats = basic_block(feats, coords, spatial, batch_size, params['res0b'])

    # down 1: 16 -> 32, k3 s2 p1
    feats, coords, spatial = sparse_conv_layer(
        feats, coords, spatial, batch_size, params['down1'],
        stride=(2, 2, 2), padding=(1, 1, 1), submanifold=False)
    feats = basic_block(feats, coords, spatial, batch_size, params['res1a'])
    feats = basic_block(feats, coords, spatial, batch_size, params['res1b'])

    # down 2: 32 -> 64, k3 s2 p1
    feats, coords, spatial = sparse_conv_layer(
        feats, coords, spatial, batch_size, params['down2'],
        stride=(2, 2, 2), padding=(1, 1, 1), submanifold=False)
    feats = basic_block(feats, coords, spatial, batch_size, params['res2a'])
    feats = basic_block(feats, coords, spatial, batch_size, params['res2b'])

    # down 3: 64 -> 128, k3 s2 p=[0,1,1]
    feats, coords, spatial = sparse_conv_layer(
        feats, coords, spatial, batch_size, params['down3'],
        stride=(2, 2, 2), padding=(0, 1, 1), submanifold=False)
    feats = basic_block(feats, coords, spatial, batch_size, params['res3a'])
    feats = basic_block(feats, coords, spatial, batch_size, params['res3b'])

    # down 4: 128 -> 128, k=(3,1,1) s=(2,1,1) p=0
    feats, coords, spatial = sparse_conv_layer(
        feats, coords, spatial, batch_size, params['down4'],
        stride=(2, 1, 1), padding=(0, 0, 0), submanifold=False)

    # .dense() -> (N, C, D, H, W) -> view(N, C*D, H, W)
    D, H, W = spatial
    Cf = feats.shape[-1]
    dense = jnp.zeros((batch_size, D, H, W, Cf), jnp.float32)
    dense = dense.at[coords[:, 0], coords[:, 1],
                     coords[:, 2], coords[:, 3]].set(feats)
    ret = jnp.transpose(dense, (0, 4, 1, 2, 3)).reshape(batch_size,
                                                        Cf * D, H, W)
    return ret


# ---------------------------------------------------------------------------
if __name__ == "__main__":
    key = jax.random.PRNGKey(0)
    num_input_features = 4
    batch_size = 2
    input_shape = [16, 16, 40]      # (W, H, D) grid; sparse_shape = [41, 16, 16]
    grid_d, grid_h, grid_w = 40, 16, 16
    n_vox = 64                      # active voxels per batch element

    k_coord, k_feat, k_param = jax.random.split(key, 3)
    coors_list = []
    for bidx in range(batch_size):
        kb = jax.random.fold_in(k_coord, bidx)
        flat = jax.random.choice(kb, grid_d * grid_h * grid_w,
                                 shape=(n_vox,), replace=False)
        z = flat // (grid_h * grid_w)
        yv = (flat // grid_w) % grid_h
        xv = flat % grid_w
        coors_list.append(jnp.stack(
            [jnp.full_like(z, bidx), z, yv, xv], axis=1))
    coors = jnp.concatenate(coors_list, axis=0).astype(jnp.int32)
    voxel_features = jax.random.normal(
        k_feat, (coors.shape[0], num_input_features), jnp.float32)

    params = make_params(k_param, num_input_features)

    out = sp_middle_resnet_fhd(voxel_features, coors, batch_size,
                               input_shape, params)
    out = jax.block_until_ready(out)
    assert out.shape == (batch_size, 128 * 2, 2, 2), out.shape
    print("KERNEL_OK")
</pallas_src>

<mosaic_0001>
module attributes {stable_mosaic.version = 11 : i64} {
  func.func @_fused_matmul_kernel(%arg0: i32, %arg1: memref<128x108xbf16, #tpu.memory_space<vmem>>, %arg2: memref<108x16xbf16, #tpu.memory_space<vmem>>, %arg3: memref<1x16xf32, #tpu.memory_space<vmem>>, %arg4: memref<1x16xf32, #tpu.memory_space<vmem>>, %arg5: memref<128x16xf32, #tpu.memory_space<vmem>>) attributes {dimension_semantics = [#tpu.dimension_semantics<parallel>], iteration_bounds = array<i64: 1>, scalar_prefetch = 0 : i64, scratch_operands = 0 : i64, tpu.core_type = #tpu.core_type<tc>, window_params = [{transform_indices = @transform_0, window_bounds = array<i64: 128, 108>}, {pipeline_mode = #tpu.pipeline_mode<synchronous>, transform_indices = @transform_1, window_bounds = array<i64: 108, 16>}, {pipeline_mode = #tpu.pipeline_mode<synchronous>, transform_indices = @transform_2, window_bounds = array<i64: 1, 16>}, {pipeline_mode = #tpu.pipeline_mode<synchronous>, transform_indices = @transform_3, window_bounds = array<i64: 1, 16>}, {transform_indices = @transform_4, window_bounds = array<i64: 128, 16>}]} {
    %c0 = arith.constant 0 : index
    %c0_0 = arith.constant 0 : index
    %0 = vector.load %arg1[%c0, %c0_0] : memref<128x108xbf16, #tpu.memory_space<vmem>>, vector<128x108xbf16>
    %c0_1 = arith.constant 0 : index
    %c0_2 = arith.constant 0 : index
    %1 = vector.load %arg2[%c0_1, %c0_2] : memref<108x16xbf16, #tpu.memory_space<vmem>>, vector<108x16xbf16>
    %cst = arith.constant dense<0.000000e+00> : vector<128x16xf32>
    %2 = tpu.matmul %0, %1, %cst {dimension_numbers = #tpu.dot_dimension_numbers<[1], [0], [0], [1], [0, 0, 1, 1], [], []>} : vector<128x108xbf16>, vector<108x16xbf16>, vector<128x16xf32> -> vector<128x16xf32>
    %c0_3 = arith.constant 0 : index
    %c0_4 = arith.constant 0 : index
    %3 = vector.load %arg3[%c0_3, %c0_4] : memref<1x16xf32, #tpu.memory_space<vmem>>, vector<1x16xf32>
    %4 = vector.broadcast %3 : vector<1x16xf32> to vector<128x16xf32>
    %5 = arith.mulf %2, %4 : vector<128x16xf32>
    %c0_5 = arith.constant 0 : index
    %c0_6 = arith.constant 0 : index
    %6 = vector.load %arg4[%c0_5, %c0_6] : memref<1x16xf32, #tpu.memory_space<vmem>>, vector<1x16xf32>
    %7 = vector.broadcast %6 : vector<1x16xf32> to vector<128x16xf32>
    %8 = arith.addf %5, %7 : vector<128x16xf32>
    %cst_7 = arith.constant 0.000000e+00 : f32
    %9 = vector.broadcast %cst_7 : f32 to vector<128x16xf32>
    %10 = arith.maximumf %8, %9 : vector<128x16xf32>
    %c0_8 = arith.constant 0 : index
    %c0_9 = arith.constant 0 : index
    %11 = vector.load %arg5[%c0_8, %c0_9] : memref<128x16xf32, #tpu.memory_space<vmem>>, vector<128x16xf32>
    tpu.vector_store %arg5[%c0_8, %c0_9], %10 {strides = array<i32>} : memref<128x16xf32, #tpu.memory_space<vmem>>, vector<128x16xf32>,
    return
  }
  func.func @transform_0(%arg0: i32) -> (i32, i32) {
    %c0_i32 = arith.constant 0 : i32
    %c0_i32_0 = arith.constant 0 : i32
    return %arg0, %c0_i32 : i32, i32
  }
  func.func @transform_1(%arg0: i32) -> (i32, i32) {
    %c0_i32 = arith.constant 0 : i32
    %c0_i32_0 = arith.constant 0 : i32
    %c0_i32_1 = arith.constant 0 : i32
    return %c0_i32, %c0_i32_0 : i32, i32
  }
  func.func @transform_2(%arg0: i32) -> (i32, i32) {
    %c0_i32 = arith.constant 0 : i32
    %c0_i32_0 = arith.constant 0 : i32
    %c0_i32_1 = arith.constant 0 : i32
    return %c0_i32, %c0_i32_0 : i32, i32
  }
  func.func @transform_3(%arg0: i32) -> (i32, i32) {
    %c0_i32 = arith.constant 0 : i32
    %c0_i32_0 = arith.constant 0 : i32
    %c0_i32_1 = arith.constant 0 : i32
    return %c0_i32, %c0_i32_0 : i32, i32
  }
  func.func @transform_4(%arg0: i32) -> (i32, i32) {
    %c0_i32 = arith.constant 0 : i32
    %c0_i32_0 = arith.constant 0 : i32
    return %arg0, %c0_i32 : i32, i32
  }
}

</mosaic_0001>

<llo_original>
// kernel: tpu_custom_call.1
$region0: #{tpu_custom_call.1}
  #allocation0 [shape = 'u32[]', space=smem, size = 0x4, offset = 0x4, fixed_abs, tag = 'smem constant byte address 0x4 - core index']
  #allocation1 [shape = 'u32[144,128]{1,0:T(1,128)}', space=vmem, size = 0x12000, scoped, tag = 'internal scratch']
  %s0 = inlined_call_operand.vmem [shape: bf16[128,108], index: 0, kind: input, shape index: {}]
  %s1 = inlined_call_operand.vmem [shape: bf16[108,16], index: 1, kind: input, shape index: {}]
  %s2 = inlined_call_operand.vmem [shape: f32[1,16], index: 2, kind: input, shape index: {}]
  %s3 = inlined_call_operand.vmem [shape: f32[1,16], index: 3, kind: input, shape index: {}]
  %s4 = inlined_call_operand.vmem [shape: f32[128,16], index: 4, kind: output, shape index: {}]
  %s5 = sld [smem:[#allocation0]]
  $region26: #{tpu_custom_call.1} parent=0
    _
  %s7 = ssub.s32 1, %s5
  %s8 = scalar_select 0, %s7, %s5
  // Predicated region
  $region2: #{tpu_custom_call.1} parent=0 // pred_check
    _
  $region3: #{tpu_custom_call.1} parent=0 // pred_check_branch
    %10 = sbr.rel (0) target = $region5
  $region4: #{tpu_custom_call.1} parent=0 // pred_region
    _
  $region5: #{tpu_custom_call.1} parent=0 // pred_fallthru
    _
  // Predicated region
  $region6: #{tpu_custom_call.1} parent=0 // pred_check
    _
  $region7: #{tpu_custom_call.1} parent=0 // pred_check_branch
    %12 = sbr.rel (0) target = $region9
  $region8: #{tpu_custom_call.1} parent=0 // pred_region
    _
  $region9: #{tpu_custom_call.1} parent=0 // pred_fallthru
    _
  // Predicated region
  $region10: #{tpu_custom_call.1} parent=0 // pred_check
    _
  $region11: #{tpu_custom_call.1} parent=0 // pred_check_branch
    %14 = sbr.rel (0) target = $region13
  $region12: #{tpu_custom_call.1} parent=0 // pred_region
    _
  $region13: #{tpu_custom_call.1} parent=0 // pred_fallthru
    _
  // Predicated region
  $region14: #{tpu_custom_call.1} parent=0 // pred_check
    _
  $region15: #{tpu_custom_call.1} parent=0 // pred_check_branch
    %16 = sbr.rel (0) target = $region17
  $region16: #{tpu_custom_call.1} parent=0 // pred_region
    _
  $region17: #{tpu_custom_call.1} parent=0 // pred_fallthru
    _
  %v18 = vld [vmem:[%s0] sm:$0xf]
  %v19 = vld [vmem:[%s0 + $0x4] sm:$0xf]
  %v20 = vld [vmem:[%s0 + $0x8] sm:$0xf]
  %v21 = vld [vmem:[%s0 + $0xc] sm:$0xf]
  %v22 = vld [vmem:[%s0 + $0x10] sm:$0xf]
  %v23 = vld [vmem:[%s0 + $0x14] sm:$0xf]
  %v24 = vld [vmem:[%s0 + $0x18] sm:$0xf]
  %v25 = vld [vmem:[%s0 + $0x1c] sm:$0xf]
  %v26 = vld [vmem:[%s0 + $0x20] sm:$0xf]
  %v27 = vld [vmem:[%s0 + $0x24] sm:$0xf]
  %v28 = vld [vmem:[%s0 + $0x28] sm:$0xf]
  %v29 = vld [vmem:[%s0 + $0x2c] sm:$0xf]
  %v30 = vld [vmem:[%s0 + $0x30] sm:$0xf]
  %v31 = vld [vmem:[%s0 + $0x34] sm:$0xf]
  %v32 = vld [vmem:[%s0 + $0x38] sm:$0xf]
  %v33 = vld [vmem:[%s0 + $0x3c] sm:$0xf]
  %v34 = vld [vmem:[%s1] sm:$0xf]
  %v35 = vld [vmem:[%s1 + $0x4] sm:$0xf]
  %v36 = vld [vmem:[%s1 + $0x8] sm:$0xf]
  %v37 = vld [vmem:[%s1 + $0xc] sm:$0xf]
  %v38 = vld [vmem:[%s1 + $0x10] sm:$0xf]
  %v39 = vld [vmem:[%s1 + $0x14] sm:$0xf]
  %v40 = vld [vmem:[%s1 + $0x18] sm:$0xf]
  %v41 = vld [vmem:[%s1 + $0x1c] sm:$0xf]
  %v42 = vld [vmem:[%s1 + $0x20] sm:$0xf]
  %v43 = vld [vmem:[%s1 + $0x24] sm:$0xf]
  %v44 = vld [vmem:[%s1 + $0x28] sm:$0xf]
  %v45 = vld [vmem:[%s1 + $0x2c] sm:$0xf]
  %v46 = vld [vmem:[%s1 + $0x30] sm:$0xf]
  %v47 = vld [vmem:[%s1 + $0x34] sm:$0x3]
  %v64 = vunpack.c.l.b16 %v18
  %v65 = vunpack.c.l.b16 %v19
  %v66 = vunpack.c.l.b16 %v20
  %v67 = vunpack.c.l.b16 %v21
  %v68 = vunpack.c.l.b16 %v22
  %v69 = vunpack.c.l.b16 %v23
  %v70 = vunpack.c.l.b16 %v24
  %v71 = vunpack.c.l.b16 %v25
  %v72 = vunpack.c.l.b16 %v26
  %v73 = vunpack.c.l.b16 %v27
  %v74 = vunpack.c.l.b16 %v28
  %v75 = vunpack.c.l.b16 %v29
  %v76 = vunpack.c.l.b16 %v30
  %v77 = vunpack.c.l.b16 %v31
  %v78 = vunpack.c.l.b16 %v32
  %v79 = vunpack.c.l.b16 %v33
  %v80 = vpack.c.b16 %v65, %v64
  %v81 = vpack.c.b16 %v67, %v66
  %v82 = vpack.c.b16 %v69, %v68
  %v83 = vpack.c.b16 %v71, %v70
  %v84 = vpack.c.b16 %v73, %v72
  %v85 = vpack.c.b16 %v75, %v74
  %v86 = vpack.c.b16 %v77, %v76
  %v87 = vpack.c.b16 %v79, %v78
  %v102 = vunpack.c.l.b16 %v34
  %v103 = vunpack.c.l.b16 %v35
  %v104 = vunpack.c.l.b16 %v36
  %v105 = vunpack.c.l.b16 %v37
  %v106 = vunpack.c.l.b16 %v38
  %v107 = vunpack.c.l.b16 %v39
  %v108 = vunpack.c.l.b16 %v40
  %v109 = vunpack.c.l.b16 %v41
  %v110 = vunpack.c.l.b16 %v42
  %v111 = vunpack.c.l.b16 %v43
  %v112 = vunpack.c.l.b16 %v44
  %v113 = vunpack.c.l.b16 %v45
  %v114 = vunpack.c.l.b16 %v46
  %v115 = vunpack.c.l.b16 %v47
  %v116 = vpack.c.b16 %v103, %v102
  %v117 = vpack.c.b16 %v105, %v104
  %v118 = vpack.c.b16 %v107, %v106
  %v119 = vpack.c.b16 %v109, %v108
  %v120 = vpack.c.b16 %v111, %v110
  %v121 = vpack.c.b16 %v113, %v112
  %v122 = vpack.c.b16 %v115, %v114
  %vm129 = vcmask 883712
  %v131 = vsel %vm129, %v80, 0
  %v134 = vsel %vm129, %v81, 0
  %v137 = vsel %vm129, %v82, 0
  %v140 = vsel %vm129, %v83, 0
  %v143 = vsel %vm129, %v84, 0
  %v146 = vsel %vm129, %v85, 0
  %v149 = vsel %vm129, %v86, 0
  %v152 = vsel %vm129, %v87, 0
  %vm154 = vcmask 1045504
  %v156 = vsel %vm154, %v122, 0
  %158 = vmatprep.subr.bf16.mxu0 0
  %159 = vmatpush1.bf16.msra.mxu0 0
  %160 = vmatprep.subr.bf16.mxu0 0
  %161 = vmatpush1.bf16.msra.mxu0 %v156
  %162 = vmatprep.subr.bf16.mxu0 0
  %163 = vmatpush1.bf16.msra.mxu0 %v121
  %164 = vmatprep.subr.bf16.mxu0 0
  %165 = vmatpush1.bf16.msra.mxu0 %v120
  %166 = vmatprep.subr.bf16.mxu0 0
  %167 = vmatpush1.bf16.msra.mxu0 %v119
  %168 = vmatprep.subr.bf16.mxu0 0
  %169 = vmatpush1.bf16.msra.mxu0 %v118
  %170 = vmatprep.subr.bf16.mxu0 0
  %171 = vmatpush1.bf16.msra.mxu0 %v117
  %172 = vmatprep.subr.bf16.mxu0 0
  %173 = vmatpush1.bf16.msra.mxu0 %v116
  %174 = vmatprep.subr.bf16.mxu0 0
  %175 = vmatpush2.bf16.msra.mxu0 0
  %176 = vmatprep.subr.bf16.mxu0 0
  %177 = vmatpush2.bf16.msra.mxu0 0
  %178 = vmatprep.subr.bf16.mxu0 0
  %179 = vmatpush2.bf16.msra.mxu0 0
  %180 = vmatprep.subr.bf16.mxu0 0
  %181 = vmatpush2.bf16.msra.mxu0 0
  %182 = vmatprep.subr.bf16.mxu0 0
  %183 = vmatpush2.bf16.msra.mxu0 0
  %184 = vmatprep.subr.bf16.mxu0 0
  %185 = vmatpush2.bf16.msra.mxu0 0
  %186 = vmatprep.subr.bf16.mxu0 0
  %187 = vmatpush2.bf16.msra.mxu0 0
  %188 = vmatprep.subr.bf16.mxu0 0
  %189 = vmatpush2.bf16.msra.mxu0 0
  %190 = vmatprep.mubr.bf16.mxu0 0
  %191 = vmatmul.mubr.bf16.gmra.mxu0 %v131
  %v192 = vpop.f32.mrf.mxu0
  %v193 = vadd.f32 0.0, %v192
  %v194 = vpop.f32.mrf.mxu0
  %v195 = vpop.f32.mrf.mxu0
  %v196 = vadd.f32 0.0, %v195
  %v197 = vpop.f32.mrf.mxu0
  %198 = vmatprep.mubr.bf16.mxu0 0
  %199 = vmatmul.mubr.bf16.gmra.mxu0 %v134
  %v200 = vpop.f32.mrf.mxu0
  %v201 = vadd.f32 0.0, %v200
  %v202 = vpop.f32.mrf.mxu0
  %v203 = vpop.f32.mrf.mxu0
  %v204 = vadd.f32 0.0, %v203
  %v205 = vpop.f32.mrf.mxu0
  %206 = vmatprep.mubr.bf16.mxu0 0
  %207 = vmatmul.mubr.bf16.gmra.mxu0 %v137
  %v208 = vpop.f32.mrf.mxu0
  %v209 = vadd.f32 0.0, %v208
  %v210 = vpop.f32.mrf.mxu0
  %v211 = vpop.f32.mrf.mxu0
  %v212 = vadd.f32 0.0, %v211
  %v213 = vpop.f32.mrf.mxu0
  %214 = vmatprep.mubr.bf16.mxu0 0
  %215 = vmatmul.mubr.bf16.gmra.mxu0 %v140
  %v216 = vpop.f32.mrf.mxu0
  %v217 = vadd.f32 0.0, %v216
  %v218 = vpop.f32.mrf.mxu0
  %v219 = vpop.f32.mrf.mxu0
  %v220 = vadd.f32 0.0, %v219
  %v221 = vpop.f32.mrf.mxu0
  %222 = vmatprep.mubr.bf16.mxu0 0
  %223 = vmatmul.mubr.bf16.gmra.mxu0 %v143
  %v224 = vpop.f32.mrf.mxu0
  %v225 = vadd.f32 0.0, %v224
  %v226 = vpop.f32.mrf.mxu0
  %v227 = vpop.f32.mrf.mxu0
  %v228 = vadd.f32 0.0, %v227
  %v229 = vpop.f32.mrf.mxu0
  %230 = vmatprep.mubr.bf16.mxu0 0
  %231 = vmatmul.mubr.bf16.gmra.mxu0 %v146
  %v232 = vpop.f32.mrf.mxu0
  %v233 = vadd.f32 0.0, %v232
  %v234 = vpop.f32.mrf.mxu0
  %v235 = vpop.f32.mrf.mxu0
  %v236 = vadd.f32 0.0, %v235
  %v237 = vpop.f32.mrf.mxu0
  %238 = vmatprep.mubr.bf16.mxu0 0
  %239 = vmatmul.mubr.bf16.gmra.mxu0 %v149
  %v240 = vpop.f32.mrf.mxu0
  %v241 = vadd.f32 0.0, %v240
  %v242 = vpop.f32.mrf.mxu0
  %v243 = vpop.f32.mrf.mxu0
  %v244 = vadd.f32 0.0, %v243
  %v245 = vpop.f32.mrf.mxu0
  %246 = vmatprep.mubr.bf16.mxu0 0
  %247 = vmatmul.mubr.bf16.gmra.mxu0 %v152
  %v248 = vpop.f32.mrf.mxu0
  %v249 = vadd.f32 0.0, %v248
  %v250 = vpop.f32.mrf.mxu0
  %v251 = vpop.f32.mrf.mxu0
  %v252 = vadd.f32 0.0, %v251
  %v253 = vpop.f32.mrf.mxu0
  %254 = vdwg.mxu0
  %v255 = vld [vmem:[%s2] sm:$0x1]
  %v257 = vlaneseq
  %v258 = vshrl.u32 %v257, 7
  %v259 = vsub.s32 0, %v258
  %v260 = vrot.slane %v255, %v259
  %v262 = vmul.f32 %v193, %v260
  %v263 = vmul.f32 %v196, %v260
  %v264 = vmul.f32 %v201, %v260
  %v265 = vmul.f32 %v204, %v260
  %v266 = vmul.f32 %v209, %v260
  %v267 = vmul.f32 %v212, %v260
  %v268 = vmul.f32 %v217, %v260
  %v269 = vmul.f32 %v220, %v260
  %v270 = vmul.f32 %v225, %v260
  %v271 = vmul.f32 %v228, %v260
  %v272 = vmul.f32 %v233, %v260
  %v273 = vmul.f32 %v236, %v260
  %v274 = vmul.f32 %v241, %v260
  %v275 = vmul.f32 %v244, %v260
  %v276 = vmul.f32 %v249, %v260
  %v277 = vmul.f32 %v252, %v260
  %v278 = vld [vmem:[%s3] sm:$0x1]
  %v280 = vlaneseq
  %v281 = vshrl.u32 %v280, 7
  %v282 = vsub.s32 0, %v281
  %v283 = vrot.slane %v278, %v282
  %v285 = vadd.f32 %v262, %v283
  %v286 = vadd.f32 %v263, %v283
  %v287 = vadd.f32 %v264, %v283
  %v288 = vadd.f32 %v265, %v283
  %v289 = vadd.f32 %v266, %v283
  %v290 = vadd.f32 %v267, %v283
  %v291 = vadd.f32 %v268, %v283
  %v292 = vadd.f32 %v269, %v283
  %v293 = vadd.f32 %v270, %v283
  %v294 = vadd.f32 %v271, %v283
  %v295 = vadd.f32 %v272, %v283
  %v296 = vadd.f32 %v273, %v283
  %v297 = vadd.f32 %v274, %v283
  %v298 = vadd.f32 %v275, %v283
  %v299 = vadd.f32 %v276, %v283
  %v300 = vadd.f32 %v277, %v283
  %v301 = vmax.f32 %v285, 0.0
  %v302 = vmax.f32 %v286, 0.0
  %v303 = vmax.f32 %v287, 0.0
  %v304 = vmax.f32 %v288, 0.0
  %v305 = vmax.f32 %v289, 0.0
  %v306 = vmax.f32 %v290, 0.0
  %v307 = vmax.f32 %v291, 0.0
  %v308 = vmax.f32 %v292, 0.0
  %v309 = vmax.f32 %v293, 0.0
  %v310 = vmax.f32 %v294, 0.0
  %v311 = vmax.f32 %v295, 0.0
  %v312 = vmax.f32 %v296, 0.0
  %v313 = vmax.f32 %v297, 0.0
  %v314 = vmax.f32 %v298, 0.0
  %v315 = vmax.f32 %v299, 0.0
  %v316 = vmax.f32 %v300, 0.0
  %vm317 = vcmask 130048
  %318 = vst.msk [vmem:[%s4] sm:$0xff] %vm317, %v301
  %319 = vst.msk [vmem:[%s4 + $0x8] sm:$0xff] %vm317, %v302
  %320 = vst.msk [vmem:[%s4 + $0x10] sm:$0xff] %vm317, %v303
  %321 = vst.msk [vmem:[%s4 + $0x18] sm:$0xff] %vm317, %v304
  %322 = vst.msk [vmem:[%s4 + $0x20] sm:$0xff] %vm317, %v305
  %323 = vst.msk [vmem:[%s4 + $0x28] sm:$0xff] %vm317, %v306
  %324 = vst.msk [vmem:[%s4 + $0x30] sm:$0xff] %vm317, %v307
  %325 = vst.msk [vmem:[%s4 + $0x38] sm:$0xff] %vm317, %v308
  %326 = vst.msk [vmem:[%s4 + $0x40] sm:$0xff] %vm317, %v309
  %327 = vst.msk [vmem:[%s4 + $0x48] sm:$0xff] %vm317, %v310
  %328 = vst.msk [vmem:[%s4 + $0x50] sm:$0xff] %vm317, %v311
  %329 = vst.msk [vmem:[%s4 + $0x58] sm:$0xff] %vm317, %v312
  %330 = vst.msk [vmem:[%s4 + $0x60] sm:$0xff] %vm317, %v313
  %331 = vst.msk [vmem:[%s4 + $0x68] sm:$0xff] %vm317, %v314
  %332 = vst.msk [vmem:[%s4 + $0x70] sm:$0xff] %vm317, %v315
  %333 = vst.msk [vmem:[%s4 + $0x78] sm:$0xff] %vm317, %v316
  // Predicated region
  $region18: #{tpu_custom_call.1} parent=0 // pred_check
    _
  $region19: #{tpu_custom_call.1} parent=0 // pred_check_branch
    %335 = sbr.rel (0) target = $region21
  $region20: #{tpu_custom_call.1} parent=0 // pred_region
    _
  $region21: #{tpu_custom_call.1} parent=0 // pred_fallthru
    _
  // Predicated region
  $region22: #{tpu_custom_call.1} parent=0 // pred_check
    _
  $region23: #{tpu_custom_call.1} parent=0 // pred_check_branch
    %337 = sbr.rel (0) target = $region25
  $region24: #{tpu_custom_call.1} parent=0 // pred_region
    _
  $region25: #{tpu_custom_call.1} parent=0 // pred_fallthru
    _

</llo_original>
